<compile_context>
chip_gen: v7x
topology: tpu7x:2x2x1
jax: 0.10.0
libtpu: 0.0.40
codegen_flags: <defaults>
</compile_context>

<pallas_src>
import jax
import jax.numpy as jnp
from jax.experimental import pallas as pl
from jax.experimental.pallas import tpu as pltpu


def _round_up(x, m):
    return (x + m - 1) // m * m


def _mapper_kernel(x_ref, w1_ref, b1_ref, w2_ref, b2_ref, o_ref):
    # Fused input cast: f32 tile from HBM -> bf16 for the MXU (free on the VPU,
    # halves x's HBM traffic vs. a wrapper-side astype).
    x = x_ref[...].astype(w1_ref.dtype)
    # Hidden layer: tanh(x @ W1 + b1); f32 accumulation, bias + tanh in f32.
    h = jnp.tanh(
        jnp.dot(x, w1_ref[...], preferred_element_type=jnp.float32)
        + b1_ref[...]
    )
    # Output layer: h @ W2 + b2 (h cast back to the weight dtype for the MXU).
    o_ref[...] = (
        jnp.dot(h.astype(w2_ref.dtype), w2_ref[...],
                preferred_element_type=jnp.float32)
        + b2_ref[...]
    ).astype(o_ref.dtype)


def prepare_mapper_params(w1, b1, w2, b2):
    """One-time parameter prep (keep OUTSIDE the per-call/jit path).

    Weights -> bf16 for the MXU, biases -> f32 row vectors.  Doing this once
    avoids re-casting (full HBM read+write of the weights) on every forward.
    """
    return (
        w1.astype(jnp.bfloat16),
        b1.astype(jnp.float32).reshape(1, -1),
        w2.astype(jnp.bfloat16),
        b2.astype(jnp.float32).reshape(1, -1),
    )


def _choose_block_b(B, block_b):
    if B < 8:
        # Block equals the full (tiny) batch dim -- always a legal block shape.
        return B
    # Multiple of 8 (f32 sublane quantum).  Aim for >= 2 grid steps so both
    # v7x TensorCores get a share of the batch, capped at block_b.
    half = _round_up(pl.cdiv(B, 2), 8)
    return max(8, min(block_b, half))


def _vmem_budget_bytes(bm, F, S, O, x_itemsize, w_itemsize, b_itemsize, o_itemsize):
    # Grid-tiled arrays (x tile, out tile) are double-buffered by the Pallas
    # pipeline.  The weights/biases use constant index_maps (fetched once) but
    # still get two buffers allocated by default, so count them twice as well.
    tiles = 2 * (bm * F * x_itemsize + bm * O * o_itemsize)
    params = 2 * ((F * S + S * O) * w_itemsize + (S + O) * b_itemsize)
    return tiles + params


def linear_mapper(image_feature, w1, b1, w2, b2, num_prefix,
                  prefix_hidden_size, *, block_b=512, out_dtype=jnp.float32):
    """Pallas implementation of LinearMapper.forward.

    image_feature: (B, image_feature_size) f32
    w1: (image_feature_size, second_size)  bf16   b1: (1, second_size)  f32
    w2: (second_size, num_prefix*hidden)   bf16   b2: (1, num_prefix*hidden) f32
    returns: (B, num_prefix, prefix_hidden_size) in out_dtype (f32 by default)
    """
    B, F = image_feature.shape
    S = w1.shape[1]
    O = w2.shape[1]
    assert w1.shape[0] == F and w2.shape[0] == S
    assert O == num_prefix * prefix_hidden_size
    b1 = b1.reshape(1, S)
    b2 = b2.reshape(1, O)

    bm = _choose_block_b(B, block_b)
    grid = (pl.cdiv(B, bm),)

    o_itemsize = jnp.dtype(out_dtype).itemsize
    budget = _vmem_budget_bytes(
        bm, F, S, O,
        jnp.dtype(image_feature.dtype).itemsize,
        jnp.dtype(w1.dtype).itemsize,
        jnp.dtype(b1.dtype).itemsize,
        o_itemsize,
    )
    # Headroom for Mosaic internal scratch; clamp to stay safe on v7x (64 MiB
    # physical VMEM) while never going below a comfortable floor.
    vmem_limit = int(min(max(4 << 20, 1.5 * budget + (1 << 20)), 64 << 20))

    cost = pl.CostEstimate(
        flops=2 * B * (F * S + S * O),
        transcendentals=B * S,
        bytes_accessed=(
            B * F * jnp.dtype(image_feature.dtype).itemsize     # x read (f32)
            + (F * S + S * O) * jnp.dtype(w1.dtype).itemsize    # weights (bf16)
            + (S + O) * jnp.dtype(b1.dtype).itemsize            # biases (f32)
            + B * O * o_itemsize                                 # output writeback
        ),
    )

    # NOTE(perf, v7x): for large real-world F/S/O add
    #   pipeline_mode=pl.Buffered(1)
    # to the four weight/bias BlockSpecs below so the loop-invariant params are
    # single-buffered in VMEM (halves their resident footprint).  Left at the
    # default here since the parameters are tiny and the default path is the
    # most widely supported.
    out = pl.pallas_call(
        _mapper_kernel,
        out_shape=jax.ShapeDtypeStruct((B, O), out_dtype),
        grid_spec=pl.GridSpec(
            grid=grid,
            in_specs=[
                # x tile follows the batch grid (last block may be partial).
                pl.BlockSpec((bm, F), lambda i: (i, 0)),
                # Weights / biases: constant index_map => fetched once,
                # VMEM-resident across all batch tiles.
                pl.BlockSpec((F, S), lambda i: (0, 0)),
                pl.BlockSpec((1, S), lambda i: (0, 0)),
                pl.BlockSpec((S, O), lambda i: (0, 0)),
                pl.BlockSpec((1, O), lambda i: (0, 0)),
            ],
            # O is a multiple of 128 -> lane-dense, unmasked stores (for the
            # full blocks; a trailing partial batch block is masked).
            out_specs=pl.BlockSpec((bm, O), lambda i: (i, 0)),
        ),
        compiler_params=pltpu.CompilerParams(
            # Batch axis is fully independent -> megacore sharding on v7x.
            dimension_semantics=("parallel",),
            vmem_limit_bytes=vmem_limit,
        ),
        cost_estimate=cost,
    )(image_feature, w1, b1, w2, b2)

    # Equivalent of PyTorch's .view(-1, num_prefix, prefix_hidden_size)
    return out.reshape(-1, num_prefix, prefix_hidden_size)


def _reference(image_feature, w1, b1, w2, b2, num_prefix, prefix_hidden_size):
    h = jnp.tanh(image_feature @ w1 + b1)
    o = h @ w2 + b2
    return o.reshape(-1, num_prefix, prefix_hidden_size)


if __name__ == "__main__":
    # Module hyperparameters (small, consistent with the forward pass)
    image_feature_size = 32
    num_prefix = 8
    prefix_hidden_size = 32
    second_size = num_prefix * prefix_hidden_size // 2  # 128
    out_size = num_prefix * prefix_hidden_size          # 256
    batch = 2

    key = jax.random.PRNGKey(0)
    k_x, k_w1, k_b1, k_w2, k_b2 = jax.random.split(key, 5)

    x = jax.random.normal(k_x, (batch, image_feature_size), dtype=jnp.float32)
    # Deterministic parameter init (synthetic; not a checkpoint load)
    w1 = jax.random.normal(k_w1, (image_feature_size, second_size), jnp.float32) * 0.05
    b1 = jax.random.normal(k_b1, (1, second_size), jnp.float32) * 0.01
    w2 = jax.random.normal(k_w2, (second_size, out_size), jnp.float32) * 0.05
    b2 = jax.random.normal(k_b2, (1, out_size), jnp.float32) * 0.01

    # One-time param prep (bf16 weights), kept outside the per-call path.
    w1b, b1f, w2b, b2f = prepare_mapper_params(w1, b1, w2, b2)

    out = linear_mapper(x, w1b, b1f, w2b, b2f, num_prefix, prefix_hidden_size)
    out = jax.block_until_ready(out)

    ref = _reference(x, w1, b1, w2, b2, num_prefix, prefix_hidden_size)
    assert out.shape == (batch, num_prefix, prefix_hidden_size), out.shape
    # bf16 MXU operands with f32 accumulation -> looser tolerance than pure f32.
    assert jnp.allclose(out, ref, atol=2e-2, rtol=2e-2), "mismatch vs reference"

    print("KERNEL_OK")
</pallas_src>

<mosaic_0001>
module attributes {stable_mosaic.version = 11 : i64} {
  func.func @_mapper_kernel(%arg0: i32, %arg1: memref<2x32xf32, #tpu.memory_space<vmem>>, %arg2: memref<32x128xbf16, #tpu.memory_space<vmem>>, %arg3: memref<1x128xf32, #tpu.memory_space<vmem>>, %arg4: memref<128x256xbf16, #tpu.memory_space<vmem>>, %arg5: memref<1x256xf32, #tpu.memory_space<vmem>>, %arg6: memref<2x256xf32, #tpu.memory_space<vmem>>) attributes {dimension_semantics = [#tpu.dimension_semantics<parallel>], iteration_bounds = array<i64: 1>, scalar_prefetch = 0 : i64, scratch_operands = 0 : i64, tpu.core_type = #tpu.core_type<tc>, window_params = [{transform_indices = @transform_0, window_bounds = array<i64: 2, 32>}, {pipeline_mode = #tpu.pipeline_mode<synchronous>, transform_indices = @transform_1, window_bounds = array<i64: 32, 128>}, {pipeline_mode = #tpu.pipeline_mode<synchronous>, transform_indices = @transform_2, window_bounds = array<i64: 1, 128>}, {pipeline_mode = #tpu.pipeline_mode<synchronous>, transform_indices = @transform_3, window_bounds = array<i64: 128, 256>}, {pipeline_mode = #tpu.pipeline_mode<synchronous>, transform_indices = @transform_4, window_bounds = array<i64: 1, 256>}, {transform_indices = @transform_5, window_bounds = array<i64: 2, 256>}]} {
    %c0 = arith.constant 0 : index
    %c0_0 = arith.constant 0 : index
    %0 = vector.load %arg1[%c0, %c0_0] : memref<2x32xf32, #tpu.memory_space<vmem>>, vector<2x32xf32>
    %1 = arith.truncf %0 : vector<2x32xf32> to vector<2x32xbf16>
    %c0_1 = arith.constant 0 : index
    %c0_2 = arith.constant 0 : index
    %2 = vector.load %arg2[%c0_1, %c0_2] : memref<32x128xbf16, #tpu.memory_space<vmem>>, vector<32x128xbf16>
    %cst = arith.constant dense<0.000000e+00> : vector<2x128xf32>
    %3 = tpu.matmul %1, %2, %cst {dimension_numbers = #tpu.dot_dimension_numbers<[1], [0], [0], [1], [0, 0, 1, 1], [], []>} : vector<2x32xbf16>, vector<32x128xbf16>, vector<2x128xf32> -> vector<2x128xf32>
    %c0_3 = arith.constant 0 : index
    %c0_4 = arith.constant 0 : index
    %4 = vector.load %arg3[%c0_3, %c0_4] : memref<1x128xf32, #tpu.memory_space<vmem>>, vector<1x128xf32>
    %5 = vector.broadcast %4 : vector<1x128xf32> to vector<2x128xf32>
    %6 = arith.addf %3, %5 : vector<2x128xf32>
    %7 = math.tanh %6 : vector<2x128xf32>
    %8 = arith.truncf %7 : vector<2x128xf32> to vector<2x128xbf16>
    %c0_5 = arith.constant 0 : index
    %c0_6 = arith.constant 0 : index
    %9 = vector.load %arg4[%c0_5, %c0_6] : memref<128x256xbf16, #tpu.memory_space<vmem>>, vector<128x256xbf16>
    %cst_7 = arith.constant dense<0.000000e+00> : vector<2x256xf32>
    %10 = tpu.matmul %8, %9, %cst_7 {dimension_numbers = #tpu.dot_dimension_numbers<[1], [0], [0], [1], [0, 0, 1, 1], [], []>} : vector<2x128xbf16>, vector<128x256xbf16>, vector<2x256xf32> -> vector<2x256xf32>
    %c0_8 = arith.constant 0 : index
    %c0_9 = arith.constant 0 : index
    %11 = vector.load %arg5[%c0_8, %c0_9] : memref<1x256xf32, #tpu.memory_space<vmem>>, vector<1x256xf32>
    %12 = vector.broadcast %11 : vector<1x256xf32> to vector<2x256xf32>
    %13 = arith.addf %10, %12 : vector<2x256xf32>
    %c0_10 = arith.constant 0 : index
    %c0_11 = arith.constant 0 : index
    %14 = vector.load %arg6[%c0_10, %c0_11] : memref<2x256xf32, #tpu.memory_space<vmem>>, vector<2x256xf32>
    tpu.vector_store %arg6[%c0_10, %c0_11], %13 {strides = array<i32>} : memref<2x256xf32, #tpu.memory_space<vmem>>, vector<2x256xf32>,
    return
  }
  func.func @transform_0(%arg0: i32) -> (i32, i32) {
    %c0_i32 = arith.constant 0 : i32
    %c0_i32_0 = arith.constant 0 : i32
    return %arg0, %c0_i32 : i32, i32
  }
  func.func @transform_1(%arg0: i32) -> (i32, i32) {
    %c0_i32 = arith.constant 0 : i32
    %c0_i32_0 = arith.constant 0 : i32
    %c0_i32_1 = arith.constant 0 : i32
    return %c0_i32, %c0_i32_0 : i32, i32
  }
  func.func @transform_2(%arg0: i32) -> (i32, i32) {
    %c0_i32 = arith.constant 0 : i32
    %c0_i32_0 = arith.constant 0 : i32
    %c0_i32_1 = arith.constant 0 : i32
    return %c0_i32, %c0_i32_0 : i32, i32
  }
  func.func @transform_3(%arg0: i32) -> (i32, i32) {
    %c0_i32 = arith.constant 0 : i32
    %c0_i32_0 = arith.constant 0 : i32
    %c0_i32_1 = arith.constant 0 : i32
    return %c0_i32, %c0_i32_0 : i32, i32
  }
  func.func @transform_4(%arg0: i32) -> (i32, i32) {
    %c0_i32 = arith.constant 0 : i32
    %c0_i32_0 = arith.constant 0 : i32
    %c0_i32_1 = arith.constant 0 : i32
    return %c0_i32, %c0_i32_0 : i32, i32
  }
  func.func @transform_5(%arg0: i32) -> (i32, i32) {
    %c0_i32 = arith.constant 0 : i32
    %c0_i32_0 = arith.constant 0 : i32
    return %arg0, %c0_i32 : i32, i32
  }
}

</mosaic_0001>

<llo_original>
// kernel: tpu_custom_call.1
$region0: #{tpu_custom_call.1}
  #allocation0 [shape = 'u32[]', space=smem, size = 0x4, offset = 0x4, fixed_abs, tag = 'smem constant byte address 0x4 - core index']
  #allocation1 [shape = 'u32[144,128]{1,0:T(1,128)}', space=vmem, size = 0x12000, scoped, tag = 'internal scratch']
  %s0 = inlined_call_operand.hbm [shape: f32[2,32], index: 0, kind: input, shape index: {}]
  %s1 = inlined_call_operand.hbm [shape: bf16[32,128], index: 1, kind: input, shape index: {}]
  %s2 = inlined_call_operand.vmem [shape: f32[1,128], index: 2, kind: input, shape index: {}]
  %s3 = inlined_call_operand.hbm [shape: bf16[128,256], index: 3, kind: input, shape index: {}]
  %s4 = inlined_call_operand.vmem [shape: f32[1,256], index: 4, kind: input, shape index: {}]
  %s5 = inlined_call_operand.hbm [shape: f32[2,256], index: 5, kind: output, shape index: {}]
  %s6 = sld [smem:[#allocation0]]
  $region42: #{tpu_custom_call.1} parent=0
    _
  %s8 = ssub.s32 1, %s6
  %s9 = scalar_select 0, %s8, %s6
  $region1: #{tpu_custom_call.1} parent=0
    #allocation2 [shape = 'u8[1024]{0}', space=vmem, size = 0x400, scoped, tag = 'input window, operand 0, single buffered']
    #allocation3 [shape = 's32[1]{0}', space=sflag, size = 0x4, scoped, tag = 'scoped memory for tpu_custom_call.1']
    #allocation4 [shape = 's32[1]{0}', space=sflag, size = 0x4, scoped, tag = 'scoped memory for tpu_custom_call.1']
    #allocation5 [shape = 'u8[8192]{0}', space=vmem, size = 0x2000, scoped, tag = 'input window, operand 1, single buffered']
    #allocation6 [shape = 's32[1]{0}', space=sflag, size = 0x4, scoped, tag = 'scoped memory for tpu_custom_call.1']
    #allocation7 [shape = 'u8[65536]{0}', space=vmem, size = 0x10000, scoped, tag = 'input window, operand 3, single buffered']
    #allocation8 [shape = 'u8[2048]{0}', space=vmem, size = 0x800, scoped, tag = 'output window, operand 0, single buffered']
    %10 = vsyncpa [#allocation3], 0
    %11 = vsyncpa [#allocation6], 0
    %12 = vsyncpa [#allocation4], 0
    // Predicated region
    $region2: #{tpu_custom_call.1} parent=1 // pred_check
      _
    $region3: #{tpu_custom_call.1} parent=1 // pred_check_branch
      %14 = sbr.rel (0) target = $region5
    $region4: #{tpu_custom_call.1} parent=1 // pred_region
      %s16 = ssub.s32 32, 32
      %17 = vsyncadd [#allocation3], %s16
      %s19 = sshll.u32 [#allocation2], 4
      %s20 = int_to_ptr.vmem [resolvable:$true] %s19
      %22 = dma.hbm_to_vmem [thread:$0]  %s0, 32, %s20, [#allocation3]
    $region5: #{tpu_custom_call.1} parent=1 // pred_fallthru
      _
    // Predicated region
    $region6: #{tpu_custom_call.1} parent=1 // pred_check
      _
    $region7: #{tpu_custom_call.1} parent=1 // pred_check_branch
      %24 = sbr.rel (0) target = $region9
    $region8: #{tpu_custom_call.1} parent=1 // pred_region
      %s26 = ssub.s32 256, 256
      %27 = vsyncadd [#allocation6], %s26
      %s28 = sshll.u32 [#allocation5], 4
      %s29 = int_to_ptr.vmem [resolvable:$true] %s28
      %34 = dma.hbm_to_vmem [thread:$0]  %s1, 256, %s29, [#allocation6], 64, 64, 4
    $region9: #{tpu_custom_call.1} parent=1 // pred_fallthru
      _
    // Predicated region
    $region10: #{tpu_custom_call.1} parent=1 // pred_check
      _
    $region11: #{tpu_custom_call.1} parent=1 // pred_check_branch
      %36 = sbr.rel (0) target = $region13
    $region12: #{tpu_custom_call.1} parent=1 // pred_region
      _
    $region13: #{tpu_custom_call.1} parent=1 // pred_fallthru
      _
    // Predicated region
    $region14: #{tpu_custom_call.1} parent=1 // pred_check
      _
    $region15: #{tpu_custom_call.1} parent=1 // pred_check_branch
      %38 = sbr.rel (0) target = $region17
    $region16: #{tpu_custom_call.1} parent=1 // pred_region
      %s40 = ssub.s32 2048, 2048
      %41 = vsyncadd [#allocation6], %s40
      %s42 = sshll.u32 [#allocation7], 4
      %s43 = int_to_ptr.vmem [resolvable:$true] %s42
      %48 = dma.hbm_to_vmem [thread:$0]  %s3, 2048, %s43, [#allocation6], 128, 128, 8
    $region17: #{tpu_custom_call.1} parent=1 // pred_fallthru
      _
    // Predicated region
    $region18: #{tpu_custom_call.1} parent=1 // pred_check
      _
    $region19: #{tpu_custom_call.1} parent=1 // pred_check_branch
      %50 = sbr.rel (0) target = $region21
    $region20: #{tpu_custom_call.1} parent=1 // pred_region
      _
    $region21: #{tpu_custom_call.1} parent=1 // pred_fallthru
      _
    // Predicated region
    $region22: #{tpu_custom_call.1} parent=1 // pred_check
      _
    $region23: #{tpu_custom_call.1} parent=1 // pred_check_branch
      %52 = sbr.rel (0) target = $region25
    $region24: #{tpu_custom_call.1} parent=1 // pred_region
      %53 = dma.done [#allocation3], 32
    $region25: #{tpu_custom_call.1} parent=1 // pred_fallthru
      _
    // Predicated region
    $region26: #{tpu_custom_call.1} parent=1 // pred_check
      _
    $region27: #{tpu_custom_call.1} parent=1 // pred_check_branch
      %55 = sbr.rel (0) target = $region29
    $region28: #{tpu_custom_call.1} parent=1 // pred_region
      %56 = dma.done [#allocation6], 256
    $region29: #{tpu_custom_call.1} parent=1 // pred_fallthru
      _
    // Predicated region
    $region30: #{tpu_custom_call.1} parent=1 // pred_check
      _
    $region31: #{tpu_custom_call.1} parent=1 // pred_check_branch
      %58 = sbr.rel (0) target = $region33
    $region32: #{tpu_custom_call.1} parent=1 // pred_region
      %59 = dma.done [#allocation6], 2048
    $region33: #{tpu_custom_call.1} parent=1 // pred_fallthru
      _
    %v61 = vld [vmem:[#allocation2] sm:$0x3]
    %v62 = vpack.c.bf16 %v61, %v61
    %v63 = vld [vmem:[#allocation5] sm:$0xf]
    %v64 = vld [vmem:[#allocation5 + $0x4] sm:$0xf]
    %v65 = vld [vmem:[#allocation5 + $0x8] sm:$0xf]
    %v66 = vld [vmem:[#allocation5 + $0xc] sm:$0xf]
    %v67 = vld [vmem:[%s2] sm:$0x1]
    %v69 = vlaneseq
    %v70 = vshrl.u32 %v69, 7
    %v71 = vsub.s32 0, %v70
    %v72 = vrot.slane %v67, %v71
    %v78 = vunpack.c.l.b16 %v63
    %v79 = vunpack.c.l.b16 %v64
    %v80 = vunpack.c.l.b16 %v65
    %v81 = vunpack.c.l.b16 %v66
    %v82 = vpack.c.b16 %v79, %v78
    %v83 = vpack.c.b16 %v81, %v80
    %vm86 = vcmask 261120
    %v88 = vsel %vm86, %v62, 0
    %90 = vmatprep.subr.bf16.mxu0 0
    %91 = vmatpush1.bf16.msra.mxu0 %v82
    %92 = vmatprep.subr.bf16.mxu0 0
    %93 = vmatpush1.bf16.msra.mxu0 %v83
    %94 = vmatprep.subr.bf16.mxu0 0
    %95 = vmatpush1.bf16.msra.mxu0 0
    %96 = vmatprep.subr.bf16.mxu0 0
    %97 = vmatpush1.bf16.msra.mxu0 0
    %98 = vmatprep.subr.bf16.mxu0 0
    %99 = vmatpush1.bf16.msra.mxu0 0
    %100 = vmatprep.subr.bf16.mxu0 0
    %101 = vmatpush1.bf16.msra.mxu0 0
    %102 = vmatprep.subr.bf16.mxu0 0
    %103 = vmatpush1.bf16.msra.mxu0 0
    %104 = vmatprep.subr.bf16.mxu0 0
    %105 = vmatpush1.bf16.msra.mxu0 0
    %106 = vmatprep.subr.bf16.mxu0 0
    %107 = vmatpush1.bf16.msra.mxu0 0
    %108 = vmatprep.subr.bf16.mxu0 0
    %109 = vmatpush1.bf16.msra.mxu0 0
    %110 = vmatprep.subr.bf16.mxu0 0
    %111 = vmatpush1.bf16.msra.mxu0 0
    %112 = vmatprep.subr.bf16.mxu0 0
    %113 = vmatpush1.bf16.msra.mxu0 0
    %114 = vmatprep.subr.bf16.mxu0 0
    %115 = vmatpush1.bf16.msra.mxu0 0
    %116 = vmatprep.subr.bf16.mxu0 0
    %117 = vmatpush1.bf16.msra.mxu0 0
    %118 = vmatprep.subr.bf16.mxu0 0
    %119 = vmatpush1.bf16.msra.mxu0 0
    %120 = vmatprep.subr.bf16.mxu0 0
    %121 = vmatpush1.bf16.msra.mxu0 0
    %122 = vmatprep.mubr.bf16.mxu0 0
    %123 = vmatmul.mubr.bf16.gmra.mrb[0].mxu0 %v88
    %v124 = vpop.f32.mrb[0].mxu0
    %v125 = vadd.f32 %v72, %v124
    %v126 = vpop.f32.mrb[0].mxu0
    %v127 = vpop.f32.mrb[0].mxu0
    %v128 = vpop.f32.mrb[0].mxu0
    %129 = vdwg.mxu0
    %v130 = vtanh.pop %v125
    %v131 = vpack.c.bf16 %v130, %v130
    %v132 = vld [vmem:[#allocation7] sm:$0xff]
    %v133 = vld [vmem:[#allocation7 + $0x8] sm:$0xff]
    %v134 = vld [vmem:[#allocation7 + $0x10] sm:$0xff]
    %v135 = vld [vmem:[#allocation7 + $0x18] sm:$0xff]
    %v136 = vld [vmem:[#allocation7 + $0x20] sm:$0xff]
    %v137 = vld [vmem:[#allocation7 + $0x28] sm:$0xff]
    %v138 = vld [vmem:[#allocation7 + $0x30] sm:$0xff]
    %v139 = vld [vmem:[#allocation7 + $0x38] sm:$0xff]
    %v140 = vld [vmem:[#allocation7 + $0x40] sm:$0xff]
    %v141 = vld [vmem:[#allocation7 + $0x48] sm:$0xff]
    %v142 = vld [vmem:[#allocation7 + $0x50] sm:$0xff]
    %v143 = vld [vmem:[#allocation7 + $0x58] sm:$0xff]
    %v144 = vld [vmem:[#allocation7 + $0x60] sm:$0xff]
    %v145 = vld [vmem:[#allocation7 + $0x68] sm:$0xff]
    %v146 = vld [vmem:[#allocation7 + $0x70] sm:$0xff]
    %v147 = vld [vmem:[#allocation7 + $0x78] sm:$0xff]
    %v148 = vld [vmem:[%s4] sm:$0x3]
    %v150 = vlaneseq
    %v151 = vshrl.u32 %v150, 7
    %v152 = vsub.s32 0, %v151
    %v153 = vrot.slane %v148, %v152
    %v154 = vlaneseq
    %v155 = vshrl.u32 %v154, 7
    %v156 = vsub.s32 1, %v155
    %v157 = vrot.slane %v148, %v156
    %v176 = vunpack.c.l.b16 %v132
    %v177 = vunpack.c.h.b16 %v132
    %v178 = vunpack.c.l.b16 %v133
    %v179 = vunpack.c.h.b16 %v133
    %v180 = vunpack.c.l.b16 %v134
    %v181 = vunpack.c.h.b16 %v134
    %v182 = vunpack.c.l.b16 %v135
    %v183 = vunpack.c.h.b16 %v135
    %v184 = vunpack.c.l.b16 %v136
    %v185 = vunpack.c.h.b16 %v136
    %v186 = vunpack.c.l.b16 %v137
    %v187 = vunpack.c.h.b16 %v137
    %v188 = vunpack.c.l.b16 %v138
    %v189 = vunpack.c.h.b16 %v138
    %v190 = vunpack.c.l.b16 %v139
    %v191 = vunpack.c.h.b16 %v139
    %v192 = vunpack.c.l.b16 %v140
    %v193 = vunpack.c.h.b16 %v140
    %v194 = vunpack.c.l.b16 %v141
    %v195 = vunpack.c.h.b16 %v141
    %v196 = vunpack.c.l.b16 %v142
    %v197 = vunpack.c.h.b16 %v142
    %v198 = vunpack.c.l.b16 %v143
    %v199 = vunpack.c.h.b16 %v143
    %v200 = vunpack.c.l.b16 %v144
    %v201 = vunpack.c.h.b16 %v144
    %v202 = vunpack.c.l.b16 %v145
    %v203 = vunpack.c.h.b16 %v145
    %v204 = vunpack.c.l.b16 %v146
    %v205 = vunpack.c.h.b16 %v146
    %v206 = vunpack.c.l.b16 %v147
    %v207 = vunpack.c.h.b16 %v147
    %v208 = vpack.c.b16 %v178, %v176
    %v209 = vpack.c.b16 %v179, %v177
    %v210 = vpack.c.b16 %v182, %v180
    %v211 = vpack.c.b16 %v183, %v181
    %v212 = vpack.c.b16 %v186, %v184
    %v213 = vpack.c.b16 %v187, %v185
    %v214 = vpack.c.b16 %v190, %v188
    %v215 = vpack.c.b16 %v191, %v189
    %v216 = vpack.c.b16 %v194, %v192
    %v217 = vpack.c.b16 %v195, %v193
    %v218 = vpack.c.b16 %v198, %v196
    %v219 = vpack.c.b16 %v199, %v197
    %v220 = vpack.c.b16 %v202, %v200
    %v221 = vpack.c.b16 %v203, %v201
    %v222 = vpack.c.b16 %v206, %v204
    %v223 = vpack.c.b16 %v207, %v205
    %240 = vmatprep.subr.bf16.mxu0 %v209
    %241 = vmatpush1.bf16.msra.mxu0 %v208
    %242 = vmatprep.subr.bf16.mxu0 %v211
    %243 = vmatpush1.bf16.msra.mxu0 %v210
    %244 = vmatprep.subr.bf16.mxu0 %v213
    %245 = vmatpush1.bf16.msra.mxu0 %v212
    %246 = vmatprep.subr.bf16.mxu0 %v215
    %247 = vmatpush1.bf16.msra.mxu0 %v214
    %248 = vmatprep.subr.bf16.mxu0 %v217
    %249 = vmatpush1.bf16.msra.mxu0 %v216
    %250 = vmatprep.subr.bf16.mxu0 %v219
    %251 = vmatpush1.bf16.msra.mxu0 %v218
    %252 = vmatprep.subr.bf16.mxu0 %v221
    %253 = vmatpush1.bf16.msra.mxu0 %v220
    %254 = vmatprep.subr.bf16.mxu0 %v223
    %255 = vmatpush1.bf16.msra.mxu0 %v222
    %256 = vmatprep.subr.bf16.mxu0 0
    %257 = vmatpush1.bf16.msra.mxu0 0
    %258 = vmatprep.subr.bf16.mxu0 0
    %259 = vmatpush1.bf16.msra.mxu0 0
    %260 = vmatprep.subr.bf16.mxu0 0
    %261 = vmatpush1.bf16.msra.mxu0 0
    %262 = vmatprep.subr.bf16.mxu0 0
    %263 = vmatpush1.bf16.msra.mxu0 0
    %264 = vmatprep.subr.bf16.mxu0 0
    %265 = vmatpush1.bf16.msra.mxu0 0
    %266 = vmatprep.subr.bf16.mxu0 0
    %267 = vmatpush1.bf16.msra.mxu0 0
    %268 = vmatprep.subr.bf16.mxu0 0
    %269 = vmatpush1.bf16.msra.mxu0 0
    %270 = vmatprep.subr.bf16.mxu0 0
    %271 = vmatpush1.bf16.msra.mxu0 0
    %272 = vmatprep.mubr.bf16.mxu0 0
    %273 = vmatmul.mubr.bf16.gmra.mrb[0].mxu0 %v131
    %v274 = vpop.f32.mrb[0].mxu0
    %v275 = vadd.f32 %v153, %v274
    %v276 = vpop.f32.mrb[0].mxu0
    %v277 = vadd.f32 %v157, %v276
    %v278 = vpop.f32.mrb[0].mxu0
    %v279 = vpop.f32.mrb[0].mxu0
    %280 = vdwg.mxu0
    %v283 = vcombine.low %v275, %v277
    %v285 = vunpack.c.l.s4 1983009808
    %v286 = vunpack.c.0.s8 %v285
    %v287 = vlaneseq
    %v288 = vshrl.u32 %v287, 7
    %v289 = vsub.s32 %v286, %v288
    %v290 = vrot.slane %v283, %v289
    %292 = vst [vmem:[#allocation8] sm:$0xf] %v290
    // Predicated region
    $region34: #{tpu_custom_call.1} parent=1 // pred_check
      _
    $region35: #{tpu_custom_call.1} parent=1 // pred_check_branch
      %294 = sbr.rel (0) target = $region37
    $region36: #{tpu_custom_call.1} parent=1 // pred_region
      %s296 = ssub.s32 64, 64
      %297 = vsyncadd [#allocation4], %s296
      %s299 = sshll.u32 [#allocation8], 4
      %s300 = int_to_ptr.vmem [resolvable:$true] %s299
      %302 = dma.vmem_to_hbm [thread:$0]  %s300, 64, %s5, [#allocation4]
    $region37: #{tpu_custom_call.1} parent=1 // pred_fallthru
      _
    // Predicated region
    $region38: #{tpu_custom_call.1} parent=1 // pred_check
      _
    $region39: #{tpu_custom_call.1} parent=1 // pred_check_branch
      %304 = sbr.rel (0) target = $region41
    $region40: #{tpu_custom_call.1} parent=1 // pred_region
      %305 = dma.done [#allocation4], 64
    $region41: #{tpu_custom_call.1} parent=1 // pred_fallthru
      _
    %306 = vsyncpa [#allocation3], 1
    %307 = vsyncpa [#allocation6], 1
    %308 = vsyncpa [#allocation4], 1

</llo_original>
